<compile_context>
chip_gen: v6e
topology: v6e:2x2x1
jax: 0.10.0
libtpu: 0.0.40
codegen_flags: <defaults>
</compile_context>

<pallas_src>
import functools

import jax
import jax.numpy as jnp
from jax import lax
from jax.experimental import pallas as pl
from jax.experimental.pallas import tpu as pltpu


# ---------------------------------------------------------------------------
# Kernels.  Grid = (batch_tiles, channel_tiles); channel axis is a P3
# accumulator (running f32 sum / max scratch, finalize on the last step).
# ---------------------------------------------------------------------------
def _channel_reduce_step(x_ref, sum_ref, max_ref):
    """Accumulate this channel tile into the running f32 sum / max scratch."""
    c = pl.program_id(1)
    x = x_ref[...]                                     # (Bt, Ct, HW)
    psum = jnp.sum(x.astype(jnp.float32), axis=1)      # (Bt, HW)
    pmax = jnp.max(x, axis=1).astype(jnp.float32)      # (Bt, HW)

    @pl.when(c == 0)
    def _():
        sum_ref[...] = psum
        max_ref[...] = pmax

    @pl.when(c > 0)
    def _():
        sum_ref[...] = sum_ref[...] + psum
        max_ref[...] = jnp.maximum(max_ref[...], pmax)


def _sa_kernel_matmul(wa_ref, wm_ref, x_ref, o_ref, sum_ref, max_ref, *, inv_c):
    """Conv via masked-Toeplitz matrices on the MXU.

    wa_ref / wm_ref: VMEM (HW, HW) f32, resident (constant block index)
    x_ref:           VMEM (Bt, Ct, HW) input tile
    o_ref:           VMEM (Bt, HW) sigmoid(conv([avg; max]))
    """
    _channel_reduce_step(x_ref, sum_ref, max_ref)

    @pl.when(pl.program_id(1) == pl.num_programs(1) - 1)
    def _():
        avg = sum_ref[...] * inv_c
        conv = (jnp.dot(avg, wa_ref[...], preferred_element_type=jnp.float32)
                + jnp.dot(max_ref[...], wm_ref[...],
                          preferred_element_type=jnp.float32))
        o_ref[...] = jax.nn.sigmoid(conv).astype(o_ref.dtype)


def _sa_kernel_roll(wa_ref, wm_ref, x_ref, o_ref, sum_ref, max_ref,
                    *, K, W, HW, inv_c):
    """Conv as 2*K*K shifted MACs (XLU rolls co-issue with the VPU MACs).

    wa_ref / wm_ref: VMEM (K*K, HW) f32 per-tap tables with the border mask
    already folded in: wa[t, :] = w[0, 0, kh, kw] * mask_t[:].
    """
    _channel_reduce_step(x_ref, sum_ref, max_ref)

    @pl.when(pl.program_id(1) == pl.num_programs(1) - 1)
    def _():
        P = K // 2
        avg = sum_ref[...] * inv_c
        mx = max_ref[...]
        acc = jnp.zeros_like(avg)
        for kh in range(K):
            for kw in range(K):
                t = kh * K + kw
                # Output position p needs input position p + dh*W + dw.
                offset = (kh - P) * W + (kw - P)
                # pltpu.roll follows np.roll semantics: out[i] = x[i - shift].
                shift = (-offset) % HW
                ra = pltpu.roll(avg, shift=shift, axis=1) if shift else avg
                rm = pltpu.roll(mx, shift=shift, axis=1) if shift else mx
                acc = (acc + wa_ref[pl.ds(t, 1), :] * ra
                       + wm_ref[pl.ds(t, 1), :] * rm)
        o_ref[...] = jax.nn.sigmoid(acc).astype(o_ref.dtype)


# ---------------------------------------------------------------------------
# Wrapper helpers
# ---------------------------------------------------------------------------
def _vmem_budgets():
    """(input double-buffer budget, scoped VMEM limit) per TPU generation."""
    try:
        cap = int(pltpu.get_tpu_info().vmem_capacity_bytes)
    except Exception:
        cap = 64 * 1024 * 1024                         # conservative fallback
    if cap >= 96 * 1024 * 1024:                        # v5e / v6e: 128 MiB/core
        return 16 * 1024 * 1024, 64 * 1024 * 1024
    return 12 * 1024 * 1024, 48 * 1024 * 1024          # v7x: 64 MiB per core


def _pick_tiles(batch, channels, hw, itemsize, budget_bytes, min_batch_steps=2):
    """Pick (Bt, Ct).

    Tiles along batch / channel must be full-extent or a multiple of 8 so the
    sublane dim of the (Bt, HW) / (Ct, HW) blocks stays legal.  Prefer the
    largest Bt that (a) keeps the double-buffered input slab under budget and
    (b) leaves >= min_batch_steps grid steps (pipelining + v7x core split).
    Fall back to channel tiling (P3 accumulator) when one batch element with
    the full channel extent does not fit the budget.
    """
    b_cands = [d for d in range(1, batch + 1)
               if batch % d == 0 and (d == batch or d % 8 == 0)]
    c_cands = [d for d in range(1, channels + 1)
               if channels % d == 0 and (d == channels or d % 8 == 0)]

    def fits(bt, ct):
        return 2 * bt * ct * hw * itemsize <= budget_bytes

    full_c = [d for d in b_cands if fits(d, channels)]
    if full_c:
        multi = [d for d in full_c if batch // d >= min_batch_steps]
        return (max(multi) if multi else max(full_c)), channels
    bt = min(b_cands)
    c_fit = [c for c in c_cands if fits(bt, c)]
    return bt, (max(c_fit) if c_fit else min(c_cands))


def _build_tap_tables(weight, H, W):
    """Per-tap weight*border-mask tables for the roll path: (K*K, HW) each."""
    K = weight.shape[-1]
    P = K // 2
    HW = H * W
    w = weight.astype(jnp.float32)
    pos = jnp.arange(HW, dtype=jnp.int32)
    row, col = pos // W, pos % W
    wa_rows, wm_rows = [], []
    for kh in range(K):
        for kw in range(K):
            dh, dw = kh - P, kw - P
            valid = ((row + dh >= 0) & (row + dh < H) &
                     (col + dw >= 0) & (col + dw < W)).astype(jnp.float32)
            wa_rows.append(w[0, 0, kh, kw] * valid)
            wm_rows.append(w[0, 1, kh, kw] * valid)
    return jnp.stack(wa_rows, axis=0), jnp.stack(wm_rows, axis=0)


def _build_toeplitz_tables(weight, H, W):
    """Masked-Toeplitz conv matrices for the MXU path: (HW, HW) each.
    Wa[p_in, p_out] = w[0, 0, kh, kw] iff p_in is tap (kh, kw) of output p_out."""
    K = weight.shape[-1]
    P = K // 2
    HW = H * W
    w = weight.astype(jnp.float32)
    pos = jnp.arange(HW, dtype=jnp.int32)
    row, col = pos // W, pos % W
    dh = row[:, None] - row[None, :]                   # row(p_in) - row(p_out)
    dw = col[:, None] - col[None, :]
    valid = (jnp.abs(dh) <= P) & (jnp.abs(dw) <= P)
    idx = jnp.clip(dh + P, 0, K - 1) * K + jnp.clip(dw + P, 0, K - 1)
    wa = jnp.where(valid, w[0, 0].reshape(-1)[idx], 0.0)
    wm = jnp.where(valid, w[0, 1].reshape(-1)[idx], 0.0)
    return wa, wm


# ---------------------------------------------------------------------------
# Public wrapper
# ---------------------------------------------------------------------------
def spatial_attention(x, weight, *, conv_mode="auto",
                      input_block_budget_bytes=None, vmem_limit_bytes=None):
    """CBAM SpatialAttention forward.

    x: (B, C, H, W); weight: (1, 2, K, K), K in {3, 7}.  Returns (B, 1, H, W).
    conv_mode: "auto" | "matmul" (MXU masked-Toeplitz) | "roll" (XLU/VPU taps).
    """
    B, C, H, W = x.shape
    K = weight.shape[-1]
    assert K in (3, 7), "kernel size must be 3 or 7"
    assert weight.shape == (1, 2, K, K), weight.shape
    HW = H * W

    default_budget, default_limit = _vmem_budgets()
    budget = input_block_budget_bytes or default_budget
    vmem_limit = vmem_limit_bytes or default_limit

    Bt, Ct = _pick_tiles(B, C, HW, x.dtype.itemsize, budget)
    grid = (B // Bt, C // Ct)

    if conv_mode == "auto":
        # MXU path when both (HW, HW) f32 tables fit comfortably (double-
        # buffered) next to the input slab; otherwise the 2*K*K-tap roll path.
        conv_mode = "matmul" if 4 * HW * HW * 4 <= 16 * 1024 * 1024 else "roll"

    if conv_mode == "matmul":
        wa, wm = _build_toeplitz_tables(weight, H, W)
        tab_shape = (HW, HW)
        kernel = functools.partial(_sa_kernel_matmul, inv_c=1.0 / C)
    elif conv_mode == "roll":
        wa, wm = _build_tap_tables(weight, H, W)
        tab_shape = (K * K, HW)
        kernel = functools.partial(_sa_kernel_roll, K=K, W=W, HW=HW, inv_c=1.0 / C)
    else:
        raise ValueError(f"unknown conv_mode: {conv_mode!r}")

    x_flat = x.reshape(B, C, HW)        # free, lane-dense view

    out_flat = pl.pallas_call(
        kernel,
        out_shape=jax.ShapeDtypeStruct((B, HW), x.dtype),
        grid_spec=pltpu.PrefetchScalarGridSpec(
            num_scalar_prefetch=0,
            grid=grid,
            in_specs=[
                pl.BlockSpec(tab_shape, lambda b, c: (0, 0)),        # wa (resident)
                pl.BlockSpec(tab_shape, lambda b, c: (0, 0)),        # wm (resident)
                pl.BlockSpec((Bt, Ct, HW), lambda b, c: (b, c, 0)),  # x tile
            ],
            out_specs=pl.BlockSpec((Bt, HW), lambda b, c: (b, 0)),
            scratch_shapes=[pltpu.VMEM((Bt, HW), jnp.float32),       # running sum
                            pltpu.VMEM((Bt, HW), jnp.float32)],      # running max
        ),
        compiler_params=pltpu.CompilerParams(
            dimension_semantics=("parallel", "arbitrary"),
            vmem_limit_bytes=vmem_limit,
        ),
    )(wa, wm, x_flat)

    return out_flat.reshape(B, 1, H, W)


# ---------------------------------------------------------------------------
# Pure-JAX reference mirroring the PyTorch forward (NCHW, cross-correlation).
# ---------------------------------------------------------------------------
def _reference(x, weight):
    avg = jnp.mean(x, axis=1, keepdims=True)
    mx = jnp.max(x, axis=1, keepdims=True)
    xc = jnp.concatenate([avg, mx], axis=1)            # (B, 2, H, W)
    P = weight.shape[-1] // 2
    out = lax.conv_general_dilated(
        xc.astype(jnp.float32), weight.astype(jnp.float32),
        window_strides=(1, 1), padding=((P, P), (P, P)),
        dimension_numbers=("NCHW", "OIHW", "NCHW"),
        precision=jax.lax.Precision.HIGHEST)
    return jax.nn.sigmoid(out).astype(x.dtype)


if __name__ == "__main__":
    key = jax.random.PRNGKey(0)
    kx, kw, kx2 = jax.random.split(key, 3)

    B, C, H, W = 2, 4, 16, 16
    x = jax.random.normal(kx, (B, C, H, W), dtype=jnp.float32)

    # kernel_size=7 (module default); synthetic Conv2d(2, 1, 7, bias=False) weight.
    w7 = 0.1 * jax.random.normal(kw, (1, 2, 7, 7), dtype=jnp.float32)
    ref7 = _reference(x, w7)

    # MXU (masked-Toeplitz) path.  f32 MXU matmuls may be run as reduced-
    # precision passes depending on the generation, so tolerance is looser.
    out_mm = jax.block_until_ready(spatial_attention(x, w7, conv_mode="matmul"))
    assert out_mm.shape == (B, 1, H, W), out_mm.shape
    assert jnp.allclose(out_mm, ref7, atol=5e-3, rtol=5e-3), (
        float(jnp.max(jnp.abs(out_mm - ref7))))

    # Roll (XLU/VPU) path: exact f32 arithmetic, tight tolerance.
    out_roll = jax.block_until_ready(spatial_attention(x, w7, conv_mode="roll"))
    assert jnp.allclose(out_roll, ref7, atol=1e-5, rtol=1e-5), (
        float(jnp.max(jnp.abs(out_roll - ref7))))

    # kernel_size=3 variant.
    w3 = 0.1 * jax.random.normal(kw, (1, 2, 3, 3), dtype=jnp.float32)
    ref3 = _reference(x, w3)
    out3 = jax.block_until_ready(spatial_attention(x, w3, conv_mode="roll"))
    assert jnp.allclose(out3, ref3, atol=1e-5, rtol=1e-5), (
        float(jnp.max(jnp.abs(out3 - ref3))))

    # Channel-tiled (P3 accumulator) path, forced with a tiny block budget.
    x2 = jax.random.normal(kx2, (2, 16, 16, 16), dtype=jnp.float32)
    ref_ct = _reference(x2, w7)
    out_ct = jax.block_until_ready(
        spatial_attention(x2, w7, conv_mode="roll",
                          input_block_budget_bytes=8 * 1024))
    assert jnp.allclose(out_ct, ref_ct, atol=1e-5, rtol=1e-5), (
        float(jnp.max(jnp.abs(out_ct - ref_ct))))

    print("KERNEL_OK")
</pallas_src>

<mosaic_0001>
module attributes {stable_mosaic.version = 11 : i64} {
  func.func @_sa_kernel_matmul(%arg0: i32, %arg1: i32, %arg2: memref<256x256xf32, #tpu.memory_space<vmem>>, %arg3: memref<256x256xf32, #tpu.memory_space<vmem>>, %arg4: memref<2x4x256xf32, #tpu.memory_space<vmem>>, %arg5: memref<2x256xf32, #tpu.memory_space<vmem>>, %arg6: memref<2x256xf32, #tpu.memory_space<vmem>>, %arg7: memref<2x256xf32, #tpu.memory_space<vmem>>) attributes {dimension_semantics = [#tpu.dimension_semantics<parallel>, #tpu.dimension_semantics<arbitrary>], iteration_bounds = array<i64: 1, 1>, scalar_prefetch = 0 : i64, scratch_operands = 2 : i64, tpu.core_type = #tpu.core_type<tc>, window_params = [{pipeline_mode = #tpu.pipeline_mode<synchronous>, transform_indices = @transform_0, window_bounds = array<i64: 256, 256>}, {pipeline_mode = #tpu.pipeline_mode<synchronous>, transform_indices = @transform_1, window_bounds = array<i64: 256, 256>}, {transform_indices = @transform_2, window_bounds = array<i64: 2, 4, 256>}, {transform_indices = @transform_3, window_bounds = array<i64: 2, 256>}]} {
    %c0 = arith.constant 0 : index
    %c0_0 = arith.constant 0 : index
    %c0_1 = arith.constant 0 : index
    %0 = vector.load %arg4[%c0, %c0_0, %c0_1] : memref<2x4x256xf32, #tpu.memory_space<vmem>>, vector<2x4x256xf32>
    %cst = arith.constant dense<0.000000e+00> : vector<2x256xf32>
    %1 = vector.multi_reduction <add>, %0, %cst [1] : vector<2x4x256xf32> to vector<2x256xf32>
    %cst_2 = arith.constant dense<0xFF800000> : vector<2x256xf32>
    %2 = vector.multi_reduction <maximumf>, %0, %cst_2 [1] : vector<2x4x256xf32> to vector<2x256xf32>
    %c0_i32 = arith.constant 0 : i32
    %3 = arith.cmpi eq, %arg1, %c0_i32 : i32
    %4 = arith.extui %3 : i1 to i32
    %c0_i32_3 = arith.constant 0 : i32
    %5 = arith.cmpi ne, %4, %c0_i32_3 : i32
    scf.if %5 {
      %c0_8 = arith.constant 0 : index
      %c0_9 = arith.constant 0 : index
      %12 = vector.load %arg6[%c0_8, %c0_9] : memref<2x256xf32, #tpu.memory_space<vmem>>, vector<2x256xf32>
      tpu.vector_store %arg6[%c0_8, %c0_9], %1 {strides = array<i32>} : memref<2x256xf32, #tpu.memory_space<vmem>>, vector<2x256xf32>,
      %c0_10 = arith.constant 0 : index
      %c0_11 = arith.constant 0 : index
      %13 = vector.load %arg7[%c0_10, %c0_11] : memref<2x256xf32, #tpu.memory_space<vmem>>, vector<2x256xf32>
      tpu.vector_store %arg7[%c0_10, %c0_11], %2 {strides = array<i32>} : memref<2x256xf32, #tpu.memory_space<vmem>>, vector<2x256xf32>,
    } else {
    }
    %c0_i32_4 = arith.constant 0 : i32
    %6 = arith.cmpi sgt, %arg1, %c0_i32_4 : i32
    %7 = arith.extui %6 : i1 to i32
    %c0_i32_5 = arith.constant 0 : i32
    %8 = arith.cmpi ne, %7, %c0_i32_5 : i32
    scf.if %8 {
      %c0_8 = arith.constant 0 : index
      %c0_9 = arith.constant 0 : index
      %12 = vector.load %arg6[%c0_8, %c0_9] : memref<2x256xf32, #tpu.memory_space<vmem>>, vector<2x256xf32>
      %13 = arith.addf %12, %1 : vector<2x256xf32>
      %c0_10 = arith.constant 0 : index
      %c0_11 = arith.constant 0 : index
      %14 = vector.load %arg6[%c0_10, %c0_11] : memref<2x256xf32, #tpu.memory_space<vmem>>, vector<2x256xf32>
      tpu.vector_store %arg6[%c0_10, %c0_11], %13 {strides = array<i32>} : memref<2x256xf32, #tpu.memory_space<vmem>>, vector<2x256xf32>,
      %c0_12 = arith.constant 0 : index
      %c0_13 = arith.constant 0 : index
      %15 = vector.load %arg7[%c0_12, %c0_13] : memref<2x256xf32, #tpu.memory_space<vmem>>, vector<2x256xf32>
      %16 = arith.maximumf %15, %2 : vector<2x256xf32>
      %c0_14 = arith.constant 0 : index
      %c0_15 = arith.constant 0 : index
      %17 = vector.load %arg7[%c0_14, %c0_15] : memref<2x256xf32, #tpu.memory_space<vmem>>, vector<2x256xf32>
      tpu.vector_store %arg7[%c0_14, %c0_15], %16 {strides = array<i32>} : memref<2x256xf32, #tpu.memory_space<vmem>>, vector<2x256xf32>,
    } else {
    }
    %c0_i32_6 = arith.constant 0 : i32
    %9 = arith.cmpi eq, %arg1, %c0_i32_6 : i32
    %10 = arith.extui %9 : i1 to i32
    %c0_i32_7 = arith.constant 0 : i32
    %11 = arith.cmpi ne, %10, %c0_i32_7 : i32
    scf.if %11 {
      %c0_8 = arith.constant 0 : index
      %c0_9 = arith.constant 0 : index
      %12 = vector.load %arg6[%c0_8, %c0_9] : memref<2x256xf32, #tpu.memory_space<vmem>>, vector<2x256xf32>
      %cst_10 = arith.constant 2.500000e-01 : f32
      %13 = vector.broadcast %cst_10 : f32 to vector<2x256xf32>
      %14 = arith.mulf %12, %13 : vector<2x256xf32>
      %c0_11 = arith.constant 0 : index
      %c0_12 = arith.constant 0 : index
      %15 = vector.load %arg2[%c0_11, %c0_12] : memref<256x256xf32, #tpu.memory_space<vmem>>, vector<256x256xf32>
      %cst_13 = arith.constant dense<0.000000e+00> : vector<2x256xf32>
      %16 = tpu.matmul %14, %15, %cst_13 {dimension_numbers = #tpu.dot_dimension_numbers<[1], [0], [0], [1], [0, 0, 1, 1], [], []>} : vector<2x256xf32>, vector<256x256xf32>, vector<2x256xf32> -> vector<2x256xf32>
      %c0_14 = arith.constant 0 : index
      %c0_15 = arith.constant 0 : index
      %17 = vector.load %arg7[%c0_14, %c0_15] : memref<2x256xf32, #tpu.memory_space<vmem>>, vector<2x256xf32>
      %c0_16 = arith.constant 0 : index
      %c0_17 = arith.constant 0 : index
      %18 = vector.load %arg3[%c0_16, %c0_17] : memref<256x256xf32, #tpu.memory_space<vmem>>, vector<256x256xf32>
      %cst_18 = arith.constant dense<0.000000e+00> : vector<2x256xf32>
      %19 = tpu.matmul %17, %18, %cst_18 {dimension_numbers = #tpu.dot_dimension_numbers<[1], [0], [0], [1], [0, 0, 1, 1], [], []>} : vector<2x256xf32>, vector<256x256xf32>, vector<2x256xf32> -> vector<2x256xf32>
      %20 = arith.addf %16, %19 : vector<2x256xf32>
      %21 = arith.negf %20 : vector<2x256xf32>
      %22 = math.exp %21 : vector<2x256xf32>
      %cst_19 = arith.constant 1.000000e+00 : f32
      %23 = vector.broadcast %cst_19 : f32 to vector<2x256xf32>
      %24 = arith.addf %23, %22 : vector<2x256xf32>
      %25 = arith.divf %23, %24 : vector<2x256xf32>
      %c0_20 = arith.constant 0 : index
      %c0_21 = arith.constant 0 : index
      %26 = vector.load %arg5[%c0_20, %c0_21] : memref<2x256xf32, #tpu.memory_space<vmem>>, vector<2x256xf32>
      tpu.vector_store %arg5[%c0_20, %c0_21], %25 {strides = array<i32>} : memref<2x256xf32, #tpu.memory_space<vmem>>, vector<2x256xf32>,
    } else {
    }
    return
  }
  func.func @transform_0(%arg0: i32, %arg1: i32) -> (i32, i32) {
    %c0_i32 = arith.constant 0 : i32
    %c0_i32_0 = arith.constant 0 : i32
    %c0_i32_1 = arith.constant 0 : i32
    return %c0_i32, %c0_i32_0 : i32, i32
  }
  func.func @transform_1(%arg0: i32, %arg1: i32) -> (i32, i32) {
    %c0_i32 = arith.constant 0 : i32
    %c0_i32_0 = arith.constant 0 : i32
    %c0_i32_1 = arith.constant 0 : i32
    return %c0_i32, %c0_i32_0 : i32, i32
  }
  func.func @transform_2(%arg0: i32, %arg1: i32) -> (i32, i32, i32) {
    %c0_i32 = arith.constant 0 : i32
    %c0_i32_0 = arith.constant 0 : i32
    return %arg0, %arg1, %c0_i32 : i32, i32, i32
  }
  func.func @transform_3(%arg0: i32, %arg1: i32) -> (i32, i32) {
    %c0_i32 = arith.constant 0 : i32
    %c0_i32_0 = arith.constant 0 : i32
    return %arg0, %c0_i32 : i32, i32
  }
}

</mosaic_0001>

<llo_original>
// kernel: tpu_custom_call.1
$region0: #{tpu_custom_call.1}
  #allocation0 [shape = 'u32[]', space=smem, size = 0x4, offset = 0x4, fixed_abs, tag = 'smem constant byte address 0x4 - core index']
  #allocation1 [shape = 'u32[144,128]{1,0:T(1,128)}', space=vmem, size = 0x12000, scoped, tag = 'internal scratch']
  #allocation2 [shape = 'f32[2,256]{1,0:T(2,128)}', space=vmem, size = 0x800, scoped, tag = 'scratch operand']
  #allocation3 [shape = 'f32[2,256]{1,0:T(2,128)}', space=vmem, size = 0x800, scoped, tag = 'scratch operand']
  %s0 = inlined_call_operand.hbm [shape: f32[256,256], index: 0, kind: input, shape index: {}]
  %s1 = inlined_call_operand.hbm [shape: f32[256,256], index: 1, kind: input, shape index: {}]
  %s2 = inlined_call_operand.hbm [shape: f32[2,4,256], index: 2, kind: input, shape index: {}]
  %s3 = inlined_call_operand.hbm [shape: f32[2,256], index: 3, kind: output, shape index: {}]
  %s4 = sld [smem:[#allocation0]]
  $region46: #{tpu_custom_call.1} parent=0
    _
  %s6 = ssub.s32 1, %s4
  %s7 = scalar_select 0, %s6, %s4
  $region1: #{tpu_custom_call.1} parent=0
    #allocation4 [shape = 'u8[262144]{0}', space=vmem, size = 0x40000, scoped, tag = 'input window, operand 0, single buffered']
    #allocation5 [shape = 's32[1]{0}', space=sflag, size = 0x4, scoped, tag = 'scoped memory for tpu_custom_call.1']
    #allocation6 [shape = 's32[1]{0}', space=sflag, size = 0x4, scoped, tag = 'scoped memory for tpu_custom_call.1']
    #allocation7 [shape = 'u8[262144]{0}', space=vmem, size = 0x40000, scoped, tag = 'input window, operand 1, single buffered']
    #allocation8 [shape = 's32[1]{0}', space=sflag, size = 0x4, scoped, tag = 'scoped memory for tpu_custom_call.1']
    #allocation9 [shape = 'u8[8192]{0}', space=vmem, size = 0x2000, scoped, tag = 'input window, operand 2, single buffered']
    #allocation10 [shape = 'u8[2048]{0}', space=vmem, size = 0x800, scoped, tag = 'output window, operand 0, single buffered']
    %8 = vsyncpa [#allocation5], 0
    %9 = vsyncpa [#allocation8], 0
    %10 = vsyncpa [#allocation6], 0
    // Predicated region
    $region2: #{tpu_custom_call.1} parent=1 // pred_check
      _
    $region3: #{tpu_custom_call.1} parent=1 // pred_check_branch
      %12 = sbr.rel (0) target = $region5
    $region4: #{tpu_custom_call.1} parent=1 // pred_region
      %s14 = ssub.s32 8192, 8192
      %15 = vsyncadd [#allocation5], %s14
      %s16 = sshll.u32 [#allocation4], 4
      %s17 = int_to_ptr.vmem [resolvable:$true] %s16
      %22 = dma.hbm_to_vmem [thread:$0]  %s0, 8192, %s17, [#allocation5], 256, 256, 16
    $region5: #{tpu_custom_call.1} parent=1 // pred_fallthru
      _
    // Predicated region
    $region6: #{tpu_custom_call.1} parent=1 // pred_check
      _
    $region7: #{tpu_custom_call.1} parent=1 // pred_check_branch
      %24 = sbr.rel (0) target = $region9
    $region8: #{tpu_custom_call.1} parent=1 // pred_region
      %s26 = ssub.s32 8192, 8192
      %27 = vsyncadd [#allocation8], %s26
      %s28 = sshll.u32 [#allocation7], 4
      %s29 = int_to_ptr.vmem [resolvable:$true] %s28
      %34 = dma.hbm_to_vmem [thread:$0]  %s1, 8192, %s29, [#allocation8], 256, 256, 16
    $region9: #{tpu_custom_call.1} parent=1 // pred_fallthru
      _
    // Predicated region
    $region10: #{tpu_custom_call.1} parent=1 // pred_check
      _
    $region11: #{tpu_custom_call.1} parent=1 // pred_check_branch
      %36 = sbr.rel (0) target = $region13
    $region12: #{tpu_custom_call.1} parent=1 // pred_region
      %s38 = ssub.s32 256, 256
      %39 = vsyncadd [#allocation8], %s38
      %s40 = sshll.u32 [#allocation9], 4
      %s41 = int_to_ptr.vmem [resolvable:$true] %s40
      %46 = dma.hbm_to_vmem [thread:$0]  %s2, 256, %s41, [#allocation8], 128, 128, 8
    $region13: #{tpu_custom_call.1} parent=1 // pred_fallthru
      _
    // Predicated region
    $region14: #{tpu_custom_call.1} parent=1 // pred_check
      _
    $region15: #{tpu_custom_call.1} parent=1 // pred_check_branch
      %48 = sbr.rel (0) target = $region17
    $region16: #{tpu_custom_call.1} parent=1 // pred_region
      %49 = dma.done [#allocation5], 8192
    $region17: #{tpu_custom_call.1} parent=1 // pred_fallthru
      _
    // Predicated region
    $region18: #{tpu_custom_call.1} parent=1 // pred_check
      _
    $region19: #{tpu_custom_call.1} parent=1 // pred_check_branch
      %51 = sbr.rel (0) target = $region21
    $region20: #{tpu_custom_call.1} parent=1 // pred_region
      %52 = dma.done [#allocation8], 8192
    $region21: #{tpu_custom_call.1} parent=1 // pred_fallthru
      _
    // Predicated region
    $region22: #{tpu_custom_call.1} parent=1 // pred_check
      _
    $region23: #{tpu_custom_call.1} parent=1 // pred_check_branch
      %54 = sbr.rel (0) target = $region25
    $region24: #{tpu_custom_call.1} parent=1 // pred_region
      %55 = dma.done [#allocation8], 256
    $region25: #{tpu_custom_call.1} parent=1 // pred_fallthru
      _
    %v56 = vld [vmem:[#allocation9] sm:$0xff]
    %v57 = vld [vmem:[#allocation9 + $0x8] sm:$0xff]
    %v60 = vcombine.high %v56, %v56
    %v61 = vcombine.high %v57, %v57
    %vm64 = vcmask 1043456
    %v65 = vsel %vm64, %v56, 0.0
    %v66 = vrot.slane %v65, 4
    %v67 = vadd.f32 %v65, %v66
    %v68 = vrot.slane %v67, 2
    %v69 = vadd.f32 %v67, %v68
    %v70 = vrot.slane %v69, 1
    %v71 = vadd.f32 %v69, %v70
    %v72 = vsel %vm64, %v60, 0.0
    %v73 = vrot.slane %v72, 4
    %v74 = vadd.f32 %v72, %v73
    %v75 = vrot.slane %v74, 2
    %v76 = vadd.f32 %v74, %v75
    %v77 = vrot.slane %v76, 1
    %v78 = vadd.f32 %v76, %v77
    %v79 = vsel %vm64, %v57, 0.0
    %v80 = vrot.slane %v79, 4
    %v81 = vadd.f32 %v79, %v80
    %v82 = vrot.slane %v81, 2
    %v83 = vadd.f32 %v81, %v82
    %v84 = vrot.slane %v83, 1
    %v85 = vadd.f32 %v83, %v84
    %v86 = vsel %vm64, %v61, 0.0
    %v87 = vrot.slane %v86, 4
    %v88 = vadd.f32 %v86, %v87
    %v89 = vrot.slane %v88, 2
    %v90 = vadd.f32 %v88, %v89
    %v91 = vrot.slane %v90, 1
    %v92 = vadd.f32 %v90, %v91
    %v93 = vsel %vm64, %v56, -inf
    %v94 = vrot.slane %v93, 4
    %v95 = vmax.f32 %v93, %v94
    %v96 = vrot.slane %v95, 2
    %v97 = vmax.f32 %v95, %v96
    %v98 = vrot.slane %v97, 1
    %v99 = vmax.f32 %v97, %v98
    %v100 = vsel %vm64, %v60, -inf
    %v101 = vrot.slane %v100, 4
    %v102 = vmax.f32 %v100, %v101
    %v103 = vrot.slane %v102, 2
    %v104 = vmax.f32 %v102, %v103
    %v105 = vrot.slane %v104, 1
    %v106 = vmax.f32 %v104, %v105
    %v107 = vsel %vm64, %v57, -inf
    %v108 = vrot.slane %v107, 4
    %v109 = vmax.f32 %v107, %v108
    %v110 = vrot.slane %v109, 2
    %v111 = vmax.f32 %v109, %v110
    %v112 = vrot.slane %v111, 1
    %v113 = vmax.f32 %v111, %v112
    %v114 = vsel %vm64, %v61, -inf
    %v115 = vrot.slane %v114, 4
    %v116 = vmax.f32 %v114, %v115
    %v117 = vrot.slane %v116, 2
    %v118 = vmax.f32 %v116, %v117
    %v119 = vrot.slane %v118, 1
    %v120 = vmax.f32 %v118, %v119
    %p121 = scmp.eq.s32.totalorder 0, 0
    // Predicated region
    $region26: #{tpu_custom_call.1} parent=1 // pred_check
      %p122 = pneg %p121
    $region27: #{tpu_custom_call.1} parent=1 // pred_check_branch
      %124 = sbr.rel (%p122) target = $region29
    $region28: #{tpu_custom_call.1} parent=1 // pred_region
      %v129 = vcombine.low %v71, %v78
      %v131 = vunpack.c.l.s4 1983009808
      %v132 = vunpack.c.0.s8 %v131
      %v133 = vlaneseq
      %v134 = vshrl.u32 %v133, 7
      %v135 = vsub.s32 %v132, %v134
      %v136 = vrot.slane %v129, %v135
      %v137 = vcombine.low %v85, %v92
      %v139 = vunpack.c.l.s4 1983009808
      %v140 = vunpack.c.0.s8 %v139
      %v141 = vlaneseq
      %v142 = vshrl.u32 %v141, 7
      %v143 = vsub.s32 %v140, %v142
      %v144 = vrot.slane %v137, %v143
      %vm145 = vcmask 1044484
      %v146 = vsel %vm145, %v136, %v136
      %vm147 = vcmask 1046534
      %v148 = vsel %vm147, %v136, %v146
      %v149 = vrot.slane %v144, 7
      %vm150 = vcmask 1041409
      %v151 = vsel %vm150, %v149, %v148
      %vm152 = vcmask 1043459
      %v153 = vsel %vm152, %v149, %v151
      %vm154 = vcmask 1045509
      %v155 = vsel %vm154, %v149, %v153
      %vm156 = vcmask 1047559
      %v157 = vsel %vm156, %v149, %v155
      %159 = vst [vmem:[#allocation2] sm:$0xf] %v157
      %v164 = vcombine.low %v99, %v106
      %v166 = vunpack.c.l.s4 1983009808
      %v167 = vunpack.c.0.s8 %v166
      %v168 = vlaneseq
      %v169 = vshrl.u32 %v168, 7
      %v170 = vsub.s32 %v167, %v169
      %v171 = vrot.slane %v164, %v170
      %v172 = vcombine.low %v113, %v120
      %v174 = vunpack.c.l.s4 1983009808
      %v175 = vunpack.c.0.s8 %v174
      %v176 = vlaneseq
      %v177 = vshrl.u32 %v176, 7
      %v178 = vsub.s32 %v175, %v177
      %v179 = vrot.slane %v172, %v178
      %v180 = vsel %vm145, %v171, %v171
      %v181 = vsel %vm147, %v171, %v180
      %v182 = vrot.slane %v179, 7
      %v183 = vsel %vm150, %v182, %v181
      %v184 = vsel %vm152, %v182, %v183
      %v185 = vsel %vm154, %v182, %v184
      %v186 = vsel %vm156, %v182, %v185
      %188 = vst [vmem:[#allocation3] sm:$0xf] %v186
    $region29: #{tpu_custom_call.1} parent=1 // pred_fallthru
      _
    %p189 = scmp.gt.s32.totalorder 0, 0
    // Predicated region
    $region30: #{tpu_custom_call.1} parent=1 // pred_check
      %p190 = pneg %p189
    $region31: #{tpu_custom_call.1} parent=1 // pred_check_branch
      %192 = sbr.rel (%p190) target = $region33
    $region32: #{tpu_custom_call.1} parent=1 // pred_region
      %v193 = vld [vmem:[#allocation2] sm:$0xf]
      %v198 = vcombine.low %v71, %v78
      %v200 = vunpack.c.l.s4 1983009808
      %v201 = vunpack.c.0.s8 %v200
      %v202 = vlaneseq
      %v203 = vshrl.u32 %v202, 7
      %v204 = vsub.s32 %v201, %v203
      %v205 = vrot.slane %v198, %v204
      %v206 = vcombine.low %v85, %v92
      %v208 = vunpack.c.l.s4 1983009808
      %v209 = vunpack.c.0.s8 %v208
      %v210 = vlaneseq
      %v211 = vshrl.u32 %v210, 7
      %v212 = vsub.s32 %v209, %v211
      %v213 = vrot.slane %v206, %v212
      %vm214 = vcmask 1044484
      %v215 = vsel %vm214, %v205, %v205
      %vm216 = vcmask 1046534
      %v217 = vsel %vm216, %v205, %v215
      %v218 = vrot.slane %v213, 7
      %vm219 = vcmask 1041409
      %v220 = vsel %vm219, %v218, %v217
      %vm221 = vcmask 1043459
      %v222 = vsel %vm221, %v218, %v220
      %vm223 = vcmask 1045509
      %v224 = vsel %vm223, %v218, %v222
      %vm225 = vcmask 1047559
      %v226 = vsel %vm225, %v218, %v224
      %v228 = vadd.f32 %v193, %v226
      %229 = vst [vmem:[#allocation2] sm:$0xf] %v228
      %v230 = vld [vmem:[#allocation3] sm:$0xf]
      %v235 = vcombine.low %v99, %v106
      %v237 = vunpack.c.l.s4 1983009808
      %v238 = vunpack.c.0.s8 %v237
      %v239 = vlaneseq
      %v240 = vshrl.u32 %v239, 7
      %v241 = vsub.s32 %v238, %v240
      %v242 = vrot.slane %v235, %v241
      %v243 = vcombine.low %v113, %v120
      %v245 = vunpack.c.l.s4 1983009808
      %v246 = vunpack.c.0.s8 %v245
      %v247 = vlaneseq
      %v248 = vshrl.u32 %v247, 7
      %v249 = vsub.s32 %v246, %v248
      %v250 = vrot.slane %v243, %v249
      %v251 = vsel %vm214, %v242, %v242
      %v252 = vsel %vm216, %v242, %v251
      %v253 = vrot.slane %v250, 7
      %v254 = vsel %vm219, %v253, %v252
      %v255 = vsel %vm221, %v253, %v254
      %v256 = vsel %vm223, %v253, %v255
      %v257 = vsel %vm225, %v253, %v256
      %v259 = vmax.f32 %v230, %v257
      %260 = vst [vmem:[#allocation3] sm:$0xf] %v259
    $region33: #{tpu_custom_call.1} parent=1 // pred_fallthru
      _
    // Predicated region
    $region34: #{tpu_custom_call.1} parent=1 // pred_check
      %p261 = pneg %p121
    $region35: #{tpu_custom_call.1} parent=1 // pred_check_branch
      %263 = sbr.rel (%p261) target = $region37
    $region36: #{tpu_custom_call.1} parent=1 // pred_region
      %v264 = vld [vmem:[#allocation2] sm:$0xf]
      %v265 = vmul.f32 %v264, 0.25
      %v266 = vld [vmem:[#allocation4] sm:$0xff]
      %v267 = vld [vmem:[#allocation4 + $0x8] sm:$0xff]
      %v268 = vld [vmem:[#allocation4 + $0x10] sm:$0xff]
      %v269 = vld [vmem:[#allocation4 + $0x18] sm:$0xff]
      %v270 = vld [vmem:[#allocation4 + $0x20] sm:$0xff]
      %v271 = vld [vmem:[#allocation4 + $0x28] sm:$0xff]
      %v272 = vld [vmem:[#allocation4 + $0x30] sm:$0xff]
      %v273 = vld [vmem:[#allocation4 + $0x38] sm:$0xff]
      %v274 = vld [vmem:[#allocation4 + $0x40] sm:$0xff]
      %v275 = vld [vmem:[#allocation4 + $0x48] sm:$0xff]
      %v276 = vld [vmem:[#allocation4 + $0x50] sm:$0xff]
      %v277 = vld [vmem:[#allocation4 + $0x58] sm:$0xff]
      %v278 = vld [vmem:[#allocation4 + $0x60] sm:$0xff]
      %v279 = vld [vmem:[#allocation4 + $0x68] sm:$0xff]
      %v280 = vld [vmem:[#allocation4 + $0x70] sm:$0xff]
      %v281 = vld [vmem:[#allocation4 + $0x78] sm:$0xff]
      %v282 = vld [vmem:[#allocation4 + $0x80] sm:$0xff]
      %v283 = vld [vmem:[#allocation4 + $0x88] sm:$0xff]
      %v284 = vld [vmem:[#allocation4 + $0x90] sm:$0xff]
      %v285 = vld [vmem:[#allocation4 + $0x98] sm:$0xff]
      %v286 = vld [vmem:[#allocation4 + $0xa0] sm:$0xff]
      %v287 = vld [vmem:[#allocation4 + $0xa8] sm:$0xff]
      %v288 = vld [vmem:[#allocation4 + $0xb0] sm:$0xff]
      %v289 = vld [vmem:[#allocation4 + $0xb8] sm:$0xff]
      %v290 = vld [vmem:[#allocation4 + $0xc0] sm:$0xff]
      %v291 = vld [vmem:[#allocation4 + $0xc8] sm:$0xff]
      %v292 = vld [vmem:[#allocation4 + $0xd0] sm:$0xff]
      %v293 = vld [vmem:[#allocation4 + $0xd8] sm:$0xff]
      %v294 = vld [vmem:[#allocation4 + $0xe0] sm:$0xff]
      %v295 = vld [vmem:[#allocation4 + $0xe8] sm:$0xff]
      %v296 = vld [vmem:[#allocation4 + $0xf0] sm:$0xff]
      %v297 = vld [vmem:[#allocation4 + $0xf8] sm:$0xff]
      %v298 = vld [vmem:[#allocation4 + $0x100] sm:$0xff]
      %v299 = vld [vmem:[#allocation4 + $0x108] sm:$0xff]
      %v300 = vld [vmem:[#allocation4 + $0x110] sm:$0xff]
      %v301 = vld [vmem:[#allocation4 + $0x118] sm:$0xff]
      %v302 = vld [vmem:[#allocation4 + $0x120] sm:$0xff]
      %v303 = vld [vmem:[#allocation4 + $0x128] sm:$0xff]
      %v304 = vld [vmem:[#allocation4 + $0x130] sm:$0xff]
      %v305 = vld [vmem:[#allocation4 + $0x138] sm:$0xff]
      %v306 = vld [vmem:[#allocation4 + $0x140] sm:$0xff]
      %v307 = vld [vmem:[#allocation4 + $0x148] sm:$0xff]
      %v308 = vld [vmem:[#allocation4 + $0x150] sm:$0xff]
      %v309 = vld [vmem:[#allocation4 + $0x158] sm:$0xff]
      %v310 = vld [vmem:[#allocation4 + $0x160] sm:$0xff]
      %v311 = vld [vmem:[#allocation4 + $0x168] sm:$0xff]
      %v312 = vld [vmem:[#allocation4 + $0x170] sm:$0xff]
      %v313 = vld [vmem:[#allocation4 + $0x178] sm:$0xff]
      %v314 = vld [vmem:[#allocation4 + $0x180] sm:$0xff]
      %v315 = vld [vmem:[#allocation4 + $0x188] sm:$0xff]
      %v316 = vld [vmem:[#allocation4 + $0x190] sm:$0xff]
      %v317 = vld [vmem:[#allocation4 + $0x198] sm:$0xff]
      %v318 = vld [vmem:[#allocation4 + $0x1a0] sm:$0xff]
      %v319 = vld [vmem:[#allocation4 + $0x1a8] sm:$0xff]
      %v320 = vld [vmem:[#allocation4 + $0x1b0] sm:$0xff]
      %v321 = vld [vmem:[#allocation4 + $0x1b8] sm:$0xff]
      %v322 = vld [vmem:[#allocation4 + $0x1c0] sm:$0xff]
      %v323 = vld [vmem:[#allocation4 + $0x1c8] sm:$0xff]
      %v324 = vld [vmem:[#allocation4 + $0x1d0] sm:$0xff]
      %v325 = vld [vmem:[#allocation4 + $0x1d8] sm:$0xff]
      %v326 = vld [vmem:[#allocation4 + $0x1e0] sm:$0xff]
      %v327 = vld [vmem:[#allocation4 + $0x1e8] sm:$0xff]
      %v328 = vld [vmem:[#allocation4 + $0x1f0] sm:$0xff]
      %v329 = vld [vmem:[#allocation4 + $0x1f8] sm:$0xff]
      %v330 = vld [vmem:[#allocation3] sm:$0xf]
      %v331 = vld [vmem:[#allocation7] sm:$0xff]
      %v332 = vld [vmem:[#allocation7 + $0x8] sm:$0xff]
      %v333 = vld [vmem:[#allocation7 + $0x10] sm:$0xff]
      %v334 = vld [vmem:[#allocation7 + $0x18] sm:$0xff]
      %v335 = vld [vmem:[#allocation7 + $0x20] sm:$0xff]
      %v336 = vld [vmem:[#allocation7 + $0x28] sm:$0xff]
      %v337 = vld [vmem:[#allocation7 + $0x30] sm:$0xff]
      %v338 = vld [vmem:[#allocation7 + $0x38] sm:$0xff]
      %v339 = vld [vmem:[#allocation7 + $0x40] sm:$0xff]
      %v340 = vld [vmem:[#allocation7 + $0x48] sm:$0xff]
      %v341 = vld [vmem:[#allocation7 + $0x50] sm:$0xff]
      %v342 = vld [vmem:[#allocation7 + $0x58] sm:$0xff]
      %v343 = vld [vmem:[#allocation7 + $0x60] sm:$0xff]
      %v344 = vld [vmem:[#allocation7 + $0x68] sm:$0xff]
      %v345 = vld [vmem:[#allocation7 + $0x70] sm:$0xff]
      %v346 = vld [vmem:[#allocation7 + $0x78] sm:$0xff]
      %v347 = vld [vmem:[#allocation7 + $0x80] sm:$0xff]
      %v348 = vld [vmem:[#allocation7 + $0x88] sm:$0xff]
      %v349 = vld [vmem:[#allocation7 + $0x90] sm:$0xff]
      %v350 = vld [vmem:[#allocation7 + $0x98] sm:$0xff]
      %v351 = vld [vmem:[#allocation7 + $0xa0] sm:$0xff]
      %v352 = vld [vmem:[#allocation7 + $0xa8] sm:$0xff]
      %v353 = vld [vmem:[#allocation7 + $0xb0] sm:$0xff]
      %v354 = vld [vmem:[#allocation7 + $0xb8] sm:$0xff]
      %v355 = vld [vmem:[#allocation7 + $0xc0] sm:$0xff]
      %v356 = vld [vmem:[#allocation7 + $0xc8] sm:$0xff]
      %v357 = vld [vmem:[#allocation7 + $0xd0] sm:$0xff]
      %v358 = vld [vmem:[#allocation7 + $0xd8] sm:$0xff]
      %v359 = vld [vmem:[#allocation7 + $0xe0] sm:$0xff]
      %v360 = vld [vmem:[#allocation7 + $0xe8] sm:$0xff]
      %v361 = vld [vmem:[#allocation7 + $0xf0] sm:$0xff]
      %v362 = vld [vmem:[#allocation7 + $0xf8] sm:$0xff]
      %v363 = vld [vmem:[#allocation7 + $0x100] sm:$0xff]
      %v364 = vld [vmem:[#allocation7 + $0x108] sm:$0xff]
      %v365 = vld [vmem:[#allocation7 + $0x110] sm:$0xff]
      %v366 = vld [vmem:[#allocation7 + $0x118] sm:$0xff]
      %v367 = vld [vmem:[#allocation7 + $0x120] sm:$0xff]
      %v368 = vld [vmem:[#allocation7 + $0x128] sm:$0xff]
      %v369 = vld [vmem:[#allocation7 + $0x130] sm:$0xff]
      %v370 = vld [vmem:[#allocation7 + $0x138] sm:$0xff]
      %v371 = vld [vmem:[#allocation7 + $0x140] sm:$0xff]
      %v372 = vld [vmem:[#allocation7 + $0x148] sm:$0xff]
      %v373 = vld [vmem:[#allocation7 + $0x150] sm:$0xff]
      %v374 = vld [vmem:[#allocation7 + $0x158] sm:$0xff]
      %v375 = vld [vmem:[#allocation7 + $0x160] sm:$0xff]
      %v376 = vld [vmem:[#allocation7 + $0x168] sm:$0xff]
      %v377 = vld [vmem:[#allocation7 + $0x170] sm:$0xff]
      %v378 = vld [vmem:[#allocation7 + $0x178] sm:$0xff]
      %v379 = vld [vmem:[#allocation7 + $0x180] sm:$0xff]
      %v380 = vld [vmem:[#allocation7 + $0x188] sm:$0xff]
      %v381 = vld [vmem:[#allocation7 + $0x190] sm:$0xff]
      %v382 = vld [vmem:[#allocation7 + $0x198] sm:$0xff]
      %v383 = vld [vmem:[#allocation7 + $0x1a0] sm:$0xff]
      %v384 = vld [vmem:[#allocation7 + $0x1a8] sm:$0xff]
      %v385 = vld [vmem:[#allocation7 + $0x1b0] sm:$0xff]
      %v386 = vld [vmem:[#allocation7 + $0x1b8] sm:$0xff]
      %v387 = vld [vmem:[#allocation7 + $0x1c0] sm:$0xff]
      %v388 = vld [vmem:[#allocation7 + $0x1c8] sm:$0xff]
      %v389 = vld [vmem:[#allocation7 + $0x1d0] sm:$0xff]
      %v390 = vld [vmem:[#allocation7 + $0x1d8] sm:$0xff]
      %v391 = vld [vmem:[#allocation7 + $0x1e0] sm:$0xff]
      %v392 = vld [vmem:[#allocation7 + $0x1e8] sm:$0xff]
      %v393 = vld [vmem:[#allocation7 + $0x1f0] sm:$0xff]
      %v394 = vld [vmem:[#allocation7 + $0x1f8] sm:$0xff]
      %v397 = vunpack.c.l.s4 1983009808
      %v398 = vunpack.c.0.s8 %v397
      %v399 = vlaneseq
      %v400 = vshrl.u32 %v399, 7
      %v401 = vsub.s32 %v398, %v400
      %v402 = vrot.slane %v330, %v401
      %v403 = vcombine.high %v402, %v402
      %406 = vmatprep.subr.mxu0 %v362
      %407 = vmatpush1.msra.mxu0 %v361
      %408 = vmatprep.subr.mxu0 %v360
      %409 = vmatpush1.msra.mxu0 %v359
      %410 = vmatprep.subr.mxu0 %v358
      %411 = vmatpush1.msra.mxu0 %v357
      %412 = vmatprep.subr.mxu0 %v356
      %413 = vmatpush1.msra.mxu0 %v355
      %414 = vmatprep.subr.mxu0 %v354
      %415 = vmatpush1.msra.mxu0 %v353
      %416 = vmatprep.subr.mxu0 %v352
      %417 = vmatpush1.msra.mxu0 %v351
      %418 = vmatprep.subr.mxu0 %v350
      %419 = vmatpush1.msra.mxu0 %v349
      %420 = vmatprep.subr.mxu0 %v348
      %421 = vmatpush1.msra.mxu0 %v347
      %422 = vmatprep.subr.mxu0 %v346
      %423 = vmatpush1.msra.mxu0 %v345
      %424 = vmatprep.subr.mxu0 %v344
      %425 = vmatpush1.msra.mxu0 %v343
      %426 = vmatprep.subr.mxu0 %v342
      %427 = vmatpush1.msra.mxu0 %v341
      %428 = vmatprep.subr.mxu0 %v340
      %429 = vmatpush1.msra.mxu0 %v339
      %430 = vmatprep.subr.mxu0 %v338
      %431 = vmatpush1.msra.mxu0 %v337
      %432 = vmatprep.subr.mxu0 %v336
      %433 = vmatpush1.msra.mxu0 %v335
      %434 = vmatprep.subr.mxu0 %v334
      %435 = vmatpush1.msra.mxu0 %v333
      %436 = vmatprep.subr.mxu0 %v332
      %437 = vmatpush1.msra.mxu0 %v331
      %438 = vmatprep.subr.mxu0 %v394
      %439 = vmatpush2.msra.mxu0 %v393
      %440 = vmatprep.subr.mxu0 %v392
      %441 = vmatpush2.msra.mxu0 %v391
      %442 = vmatprep.subr.mxu0 %v390
      %443 = vmatpush2.msra.mxu0 %v389
      %444 = vmatprep.subr.mxu0 %v388
      %445 = vmatpush2.msra.mxu0 %v387
      %446 = vmatprep.subr.mxu0 %v386
      %447 = vmatpush2.msra.mxu0 %v385
      %448 = vmatprep.subr.mxu0 %v384
      %449 = vmatpush2.msra.mxu0 %v383
      %450 = vmatprep.subr.mxu0 %v382
      %451 = vmatpush2.msra.mxu0 %v381
      %452 = vmatprep.subr.mxu0 %v380
      %453 = vmatpush2.msra.mxu0 %v379
      %454 = vmatprep.subr.mxu0 %v378
      %455 = vmatpush2.msra.mxu0 %v377
      %456 = vmatprep.subr.mxu0 %v376
      %457 = vmatpush2.msra.mxu0 %v375
      %458 = vmatprep.subr.mxu0 %v374
      %459 = vmatpush2.msra.mxu0 %v373
      %460 = vmatprep.subr.mxu0 %v372
      %461 = vmatpush2.msra.mxu0 %v371
      %462 = vmatprep.subr.mxu0 %v370
      %463 = vmatpush2.msra.mxu0 %v369
      %464 = vmatprep.subr.mxu0 %v368
      %465 = vmatpush2.msra.mxu0 %v367
      %466 = vmatprep.subr.mxu0 %v366
      %467 = vmatpush2.msra.mxu0 %v365
      %468 = vmatprep.subr.mxu0 %v364
      %469 = vmatpush2.msra.mxu0 %v363
      %470 = vmatprep.mubr.f32.mxu0 %v403
      %471 = vmatmul.mubr.f32.gmra.mxu0 %v402
      %v472 = vpop.f32.mrf.mxu0
      %v473 = vadd.f32 0.0, %v472
      %v474 = vpop.f32.mrf.mxu0
      %v475 = vadd.f32 0.0, %v474
      %476 = vdwg.mxu0
      %v479 = vunpack.c.l.s4 1983009808
      %v480 = vunpack.c.0.s8 %v479
      %v481 = vlaneseq
      %v482 = vshrl.u32 %v481, 7
      %v483 = vsub.s32 %v480, %v482
      %v484 = vrot.slane %v265, %v483
      %v485 = vcombine.high %v484, %v484
      %488 = vmatprep.subr.mxu0 %v297
      %489 = vmatpush1.msra.mxu0 %v296
      %490 = vmatprep.subr.mxu0 %v295
      %491 = vmatpush1.msra.mxu0 %v294
      %492 = vmatprep.subr.mxu0 %v293
      %493 = vmatpush1.msra.mxu0 %v292
      %494 = vmatprep.subr.mxu0 %v291
      %495 = vmatpush1.msra.mxu0 %v290
      %496 = vmatprep.subr.mxu0 %v289
      %497 = vmatpush1.msra.mxu0 %v288
      %498 = vmatprep.subr.mxu0 %v287
      %499 = vmatpush1.msra.mxu0 %v286
      %500 = vmatprep.subr.mxu0 %v285
      %501 = vmatpush1.msra.mxu0 %v284
      %502 = vmatprep.subr.mxu0 %v283
      %503 = vmatpush1.msra.mxu0 %v282
      %504 = vmatprep.subr.mxu0 %v281
      %505 = vmatpush1.msra.mxu0 %v280
      %506 = vmatprep.subr.mxu0 %v279
      %507 = vmatpush1.msra.mxu0 %v278
      %508 = vmatprep.subr.mxu0 %v277
      %509 = vmatpush1.msra.mxu0 %v276
      %510 = vmatprep.subr.mxu0 %v275
      %511 = vmatpush1.msra.mxu0 %v274
      %512 = vmatprep.subr.mxu0 %v273
      %513 = vmatpush1.msra.mxu0 %v272
      %514 = vmatprep.subr.mxu0 %v271
      %515 = vmatpush1.msra.mxu0 %v270
      %516 = vmatprep.subr.mxu0 %v269
      %517 = vmatpush1.msra.mxu0 %v268
      %518 = vmatprep.subr.mxu0 %v267
      %519 = vmatpush1.msra.mxu0 %v266
      %520 = vmatprep.subr.mxu0 %v329
      %521 = vmatpush2.msra.mxu0 %v328
      %522 = vmatprep.subr.mxu0 %v327
      %523 = vmatpush2.msra.mxu0 %v326
      %524 = vmatprep.subr.mxu0 %v325
      %525 = vmatpush2.msra.mxu0 %v324
      %526 = vmatprep.subr.mxu0 %v323
      %527 = vmatpush2.msra.mxu0 %v322
      %528 = vmatprep.subr.mxu0 %v321
      %529 = vmatpush2.msra.mxu0 %v320
      %530 = vmatprep.subr.mxu0 %v319
      %531 = vmatpush2.msra.mxu0 %v318
      %532 = vmatprep.subr.mxu0 %v317
      %533 = vmatpush2.msra.mxu0 %v316
      %534 = vmatprep.subr.mxu0 %v315
      %535 = vmatpush2.msra.mxu0 %v314
      %536 = vmatprep.subr.mxu0 %v313
      %537 = vmatpush2.msra.mxu0 %v312
      %538 = vmatprep.subr.mxu0 %v311
      %539 = vmatpush2.msra.mxu0 %v310
      %540 = vmatprep.subr.mxu0 %v309
      %541 = vmatpush2.msra.mxu0 %v308
      %542 = vmatprep.subr.mxu0 %v307
      %543 = vmatpush2.msra.mxu0 %v306
      %544 = vmatprep.subr.mxu0 %v305
      %545 = vmatpush2.msra.mxu0 %v304
      %546 = vmatprep.subr.mxu0 %v303
      %547 = vmatpush2.msra.mxu0 %v302
      %548 = vmatprep.subr.mxu0 %v301
      %549 = vmatpush2.msra.mxu0 %v300
      %550 = vmatprep.subr.mxu0 %v299
      %551 = vmatpush2.msra.mxu0 %v298
      %552 = vmatprep.mubr.f32.mxu0 %v485
      %553 = vmatmul.mubr.f32.gmra.mxu0 %v484
      %v554 = vpop.f32.mrf.mxu0
      %v555 = vadd.f32 %v473, %v554
      %v556 = vpop.f32.mrf.mxu0
      %v557 = vadd.f32 %v475, %v556
      %558 = vdwg.mxu0
      %v559 = vxor.u32 %v555, 2147483648
      %v560 = vxor.u32 %v557, 2147483648
      %v561 = vmul.f32 %v559, 1.442695
      %v562 = vpow.pop %v561
      %v563 = vmul.f32 %v560, 1.442695
      %v564 = vpow.pop %v563
      %v565 = vadd.f32 %v562, 1.0
      %v566 = vadd.f32 %v564, 1.0
      %v567 = vrcp.pop %v565
      %v568 = vmul.f32 1.0, %v567
      %v569 = vrcp.pop %v566
      %v570 = vmul.f32 1.0, %v569
      %v573 = vcombine.low %v568, %v570
      %v575 = vunpack.c.l.s4 1983009808
      %v576 = vunpack.c.0.s8 %v575
      %v577 = vlaneseq
      %v578 = vshrl.u32 %v577, 7
      %v579 = vsub.s32 %v576, %v578
      %v580 = vrot.slane %v573, %v579
      %582 = vst [vmem:[#allocation10] sm:$0xf] %v580
    $region37: #{tpu_custom_call.1} parent=1 // pred_fallthru
      _
    // Predicated region
    $region38: #{tpu_custom_call.1} parent=1 // pred_check
      _
    $region39: #{tpu_custom_call.1} parent=1 // pred_check_branch
      %584 = sbr.rel (0) target = $region41
    $region40: #{tpu_custom_call.1} parent=1 // pred_region
      %s586 = ssub.s32 64, 64
      %587 = vsyncadd [#allocation6], %s586
      %s589 = sshll.u32 [#allocation10], 4
      %s590 = int_to_ptr.vmem [resolvable:$true] %s589
      %592 = dma.vmem_to_hbm [thread:$0]  %s590, 64, %s3, [#allocation6]
    $region41: #{tpu_custom_call.1} parent=1 // pred_fallthru
      _
    // Predicated region
    $region42: #{tpu_custom_call.1} parent=1 // pred_check
      _
    $region43: #{tpu_custom_call.1} parent=1 // pred_check_branch
      %594 = sbr.rel (0) target = $region45
    $region44: #{tpu_custom_call.1} parent=1 // pred_region
      %595 = dma.done [#allocation6], 64
    $region45: #{tpu_custom_call.1} parent=1 // pred_fallthru
      _
    %596 = vsyncpa [#allocation5], 1
    %597 = vsyncpa [#allocation8], 1
    %598 = vsyncpa [#allocation6], 1

</llo_original>
